<compile_context>
chip_gen: v7x
topology: tpu7x:2x2x1
jax: 0.10.0
libtpu: 0.0.40
codegen_flags: <defaults>
</compile_context>

<pallas_src>
import math
from functools import partial

import jax
import jax.numpy as jnp
from jax import lax
from jax.experimental import pallas as pl
from jax.experimental.pallas import tpu as pltpu

IN_CHANNELS = 32
KERNEL_SIZE = 5
LN_EPS = 1e-5
BN_EPS = 1e-5


# --------------------------- fused Pallas kernel ---------------------------

def _conv_module_kernel(x_ref, ln_g_ref, ln_b_ref, w1_ref, b1_ref,
                        w2_ref, b2_ref, bn_scale_ref, bn_shift_ref,
                        w3_ref, b3_ref, o_ref, *, kernel_size):
    # x_ref: (T, C) tile of the current batch element; everything stays in VMEM.
    x = x_ref[...]
    T, C = x.shape

    # --- LayerNorm over channels ---
    mean = jnp.mean(x, axis=-1, keepdims=True)
    var = jnp.mean(jnp.square(x - mean), axis=-1, keepdims=True)
    xn = (x - mean) * lax.rsqrt(var + LN_EPS)
    xn = xn * ln_g_ref[...] + ln_b_ref[...]

    # --- pointwise Conv1d C -> 2C (single MXU matmul) + Swish ---
    h = jnp.dot(xn, w1_ref[...], preferred_element_type=jnp.float32) + b1_ref[...]
    h = h * jax.nn.sigmoid(h)                         # Swish (exp goes to EUP)

    # --- Conv1d 2C -> 2C, kernel_size K, same padding: im2col -> one matmul ---
    pad = (kernel_size - 1) // 2
    two_c = h.shape[-1]
    zpad = jnp.zeros((pad, two_c), jnp.float32)
    h_pad = jnp.concatenate([zpad, h, zpad], axis=0)              # (T + 2*pad, 2C)
    cols = jnp.concatenate(
        [h_pad[k:k + T, :] for k in range(kernel_size)], axis=-1)  # (T, K*2C)
    g = jnp.dot(cols, w2_ref[...], preferred_element_type=jnp.float32) + b2_ref[...]

    # --- GLU along channels ---
    y = g[:, :C] * jax.nn.sigmoid(g[:, C:])

    # --- BatchNorm1d (inference), pre-folded scale/shift ---
    y = y * bn_scale_ref[...] + bn_shift_ref[...]

    # --- pointwise Conv1d C -> C; Dropout is identity at inference ---
    o_ref[...] = jnp.dot(y, w3_ref[...], preferred_element_type=jnp.float32) + b3_ref[...]


# --------------------------- wrapper ---------------------------

def conv_module_forward(params, inputs, *, kernel_size=KERNEL_SIZE):
    B, T, C = inputs.shape
    two_c = 2 * C
    K = kernel_size

    # Fold BatchNorm (eval, running stats) into a single per-channel scale/shift.
    bn_scale = params["bn_gamma"] / jnp.sqrt(params["bn_rv"] + BN_EPS)
    bn_shift = params["bn_beta"] - params["bn_rm"] * bn_scale

    # Pre-arrange conv weights as channel-last matmul operands (no in-kernel transposes).
    w1 = jnp.transpose(params["w1"][:, :, 0])                             # (C, 2C)
    w2 = jnp.transpose(params["w2"], (2, 1, 0)).reshape(K * two_c, two_c)  # (K*2C, 2C)
    w3 = jnp.transpose(params["w3"][:, :, 0])                             # (C, C)

    row = lambda v: v.reshape(1, -1).astype(jnp.float32)
    operands = [
        row(params["ln_gamma"]), row(params["ln_beta"]),
        w1, row(params["b1"]),
        w2, row(params["b2"]),
        row(bn_scale), row(bn_shift),
        w3, row(params["b3"]),
    ]

    tile_spec = pl.BlockSpec((None, T, C), lambda b: (b, 0, 0))
    full_spec = lambda a: pl.BlockSpec(a.shape, lambda b: (0, 0))

    return pl.pallas_call(
        partial(_conv_module_kernel, kernel_size=K),
        out_shape=jax.ShapeDtypeStruct((B, T, C), jnp.float32),
        grid=(B,),
        in_specs=[tile_spec] + [full_spec(a) for a in operands],
        out_specs=tile_spec,
        compiler_params=pltpu.CompilerParams(dimension_semantics=("parallel",)),
    )(inputs, *operands)


# --------------------------- params & pure-JAX reference ---------------------------

def init_params(key, in_channels=IN_CHANNELS, kernel_size=KERNEL_SIZE):
    C = in_channels
    ks = jax.random.split(key, 3)

    def conv_init(k, out_ch, in_ch, ksize):
        bound = 1.0 / math.sqrt(in_ch * ksize)
        kw, kb = jax.random.split(k)
        w = jax.random.uniform(kw, (out_ch, in_ch, ksize), jnp.float32, -bound, bound)
        b = jax.random.uniform(kb, (out_ch,), jnp.float32, -bound, bound)
        return w, b

    w1, b1 = conv_init(ks[0], 2 * C, C, 1)
    w2, b2 = conv_init(ks[1], 2 * C, 2 * C, kernel_size)
    w3, b3 = conv_init(ks[2], C, C, 1)
    return dict(
        ln_gamma=jnp.ones((C,), jnp.float32), ln_beta=jnp.zeros((C,), jnp.float32),
        w1=w1, b1=b1, w2=w2, b2=b2, w3=w3, b3=b3,
        bn_gamma=jnp.ones((C,), jnp.float32), bn_beta=jnp.zeros((C,), jnp.float32),
        bn_rm=jnp.zeros((C,), jnp.float32), bn_rv=jnp.ones((C,), jnp.float32),
    )


def ref_forward(params, x, *, kernel_size=KERNEL_SIZE):
    """Independent pure-JAX/XLA reference mirroring the PyTorch module (eval mode)."""
    mean = x.mean(-1, keepdims=True)
    var = ((x - mean) ** 2).mean(-1, keepdims=True)
    xn = (x - mean) / jnp.sqrt(var + LN_EPS) * params["ln_gamma"] + params["ln_beta"]
    xt = jnp.transpose(xn, (0, 2, 1))                                  # (B, C, T)
    dn = ("NCH", "OIH", "NCH")
    h = lax.conv_general_dilated(xt, params["w1"], (1,), [(0, 0)], dimension_numbers=dn)
    h = h + params["b1"][None, :, None]
    h = h * jax.nn.sigmoid(h)
    pad = (kernel_size - 1) // 2
    g = lax.conv_general_dilated(h, params["w2"], (1,), [(pad, pad)], dimension_numbers=dn)
    g = g + params["b2"][None, :, None]
    C = x.shape[-1]
    y = g[:, :C, :] * jax.nn.sigmoid(g[:, C:, :])
    scale = params["bn_gamma"] / jnp.sqrt(params["bn_rv"] + BN_EPS)
    shift = params["bn_beta"] - params["bn_rm"] * scale
    y = y * scale[None, :, None] + shift[None, :, None]
    z = lax.conv_general_dilated(y, params["w3"], (1,), [(0, 0)], dimension_numbers=dn)
    z = z + params["b3"][None, :, None]
    return jnp.transpose(z, (0, 2, 1))


if __name__ == "__main__":
    B, T, C = 2, 16, IN_CHANNELS
    root = jax.random.PRNGKey(0)
    kx, kp = jax.random.split(root)
    x = jax.random.normal(kx, (B, T, C), jnp.float32)
    params = init_params(kp)

    out = conv_module_forward(params, x)
    jax.block_until_ready(out)

    assert out.shape == (B, T, C)
    assert bool(jnp.all(jnp.isfinite(out)))
    ref = ref_forward(params, x)
    assert bool(jnp.allclose(out, ref, atol=2e-3, rtol=2e-3)), \
        float(jnp.max(jnp.abs(out - ref)))
    print("KERNEL_OK")
</pallas_src>

<mosaic_0001>
module attributes {stable_mosaic.version = 11 : i64} {
  func.func @_conv_module_kernel(%arg0: i32, %arg1: memref<1x16x32xf32, #tpu.memory_space<vmem>>, %arg2: memref<1x32xf32, #tpu.memory_space<vmem>>, %arg3: memref<1x32xf32, #tpu.memory_space<vmem>>, %arg4: memref<32x64xf32, #tpu.memory_space<vmem>>, %arg5: memref<1x64xf32, #tpu.memory_space<vmem>>, %arg6: memref<320x64xf32, #tpu.memory_space<vmem>>, %arg7: memref<1x64xf32, #tpu.memory_space<vmem>>, %arg8: memref<1x32xf32, #tpu.memory_space<vmem>>, %arg9: memref<1x32xf32, #tpu.memory_space<vmem>>, %arg10: memref<32x32xf32, #tpu.memory_space<vmem>>, %arg11: memref<1x32xf32, #tpu.memory_space<vmem>>, %arg12: memref<1x16x32xf32, #tpu.memory_space<vmem>>) attributes {dimension_semantics = [#tpu.dimension_semantics<parallel>], iteration_bounds = array<i64: 2>, scalar_prefetch = 0 : i64, scratch_operands = 0 : i64, tpu.core_type = #tpu.core_type<tc>, window_params = [{transform_indices = @transform_0, window_bounds = array<i64: 1, 16, 32>}, {pipeline_mode = #tpu.pipeline_mode<synchronous>, transform_indices = @transform_1, window_bounds = array<i64: 1, 32>}, {pipeline_mode = #tpu.pipeline_mode<synchronous>, transform_indices = @transform_2, window_bounds = array<i64: 1, 32>}, {pipeline_mode = #tpu.pipeline_mode<synchronous>, transform_indices = @transform_3, window_bounds = array<i64: 32, 64>}, {pipeline_mode = #tpu.pipeline_mode<synchronous>, transform_indices = @transform_4, window_bounds = array<i64: 1, 64>}, {pipeline_mode = #tpu.pipeline_mode<synchronous>, transform_indices = @transform_5, window_bounds = array<i64: 320, 64>}, {pipeline_mode = #tpu.pipeline_mode<synchronous>, transform_indices = @transform_6, window_bounds = array<i64: 1, 64>}, {pipeline_mode = #tpu.pipeline_mode<synchronous>, transform_indices = @transform_7, window_bounds = array<i64: 1, 32>}, {pipeline_mode = #tpu.pipeline_mode<synchronous>, transform_indices = @transform_8, window_bounds = array<i64: 1, 32>}, {pipeline_mode = #tpu.pipeline_mode<synchronous>, transform_indices = @transform_9, window_bounds = array<i64: 32, 32>}, {pipeline_mode = #tpu.pipeline_mode<synchronous>, transform_indices = @transform_10, window_bounds = array<i64: 1, 32>}, {transform_indices = @transform_11, window_bounds = array<i64: 1, 16, 32>}]} {
    %c0 = arith.constant 0 : index
    %c0_0 = arith.constant 0 : index
    %c0_1 = arith.constant 0 : index
    %0 = vector.load %arg1[%c0, %c0_0, %c0_1] : memref<1x16x32xf32, #tpu.memory_space<vmem>>, vector<1x16x32xf32>
    %1 = vector.shape_cast %0 : vector<1x16x32xf32> to vector<16x32xf32>
    %cst = arith.constant dense<0.000000e+00> : vector<16xf32>
    %2 = vector.multi_reduction <add>, %1, %cst [1] : vector<16x32xf32> to vector<16xf32>
    %3 = vector.shape_cast %2 : vector<16xf32> to vector<16x1xf32>
    %cst_2 = arith.constant 3.200000e+01 : f32
    %4 = vector.broadcast %cst_2 : f32 to vector<16x1xf32>
    %5 = arith.divf %3, %4 : vector<16x1xf32>
    %6 = vector.broadcast %5 : vector<16x1xf32> to vector<16x32xf32>
    %7 = arith.subf %1, %6 : vector<16x32xf32>
    %8 = arith.mulf %7, %7 : vector<16x32xf32>
    %cst_3 = arith.constant dense<0.000000e+00> : vector<16xf32>
    %9 = vector.multi_reduction <add>, %8, %cst_3 [1] : vector<16x32xf32> to vector<16xf32>
    %10 = vector.shape_cast %9 : vector<16xf32> to vector<16x1xf32>
    %cst_4 = arith.constant 3.200000e+01 : f32
    %11 = vector.broadcast %cst_4 : f32 to vector<16x1xf32>
    %12 = arith.divf %10, %11 : vector<16x1xf32>
    %13 = vector.broadcast %5 : vector<16x1xf32> to vector<16x32xf32>
    %14 = arith.subf %1, %13 : vector<16x32xf32>
    %cst_5 = arith.constant 9.99999974E-6 : f32
    %15 = vector.broadcast %cst_5 : f32 to vector<16x1xf32>
    %16 = arith.addf %12, %15 : vector<16x1xf32>
    %17 = math.rsqrt %16 : vector<16x1xf32>
    %18 = vector.broadcast %17 : vector<16x1xf32> to vector<16x32xf32>
    %19 = arith.mulf %14, %18 : vector<16x32xf32>
    %c0_6 = arith.constant 0 : index
    %c0_7 = arith.constant 0 : index
    %20 = vector.load %arg2[%c0_6, %c0_7] : memref<1x32xf32, #tpu.memory_space<vmem>>, vector<1x32xf32>
    %21 = vector.broadcast %20 : vector<1x32xf32> to vector<16x32xf32>
    %22 = arith.mulf %19, %21 : vector<16x32xf32>
    %c0_8 = arith.constant 0 : index
    %c0_9 = arith.constant 0 : index
    %23 = vector.load %arg3[%c0_8, %c0_9] : memref<1x32xf32, #tpu.memory_space<vmem>>, vector<1x32xf32>
    %24 = vector.broadcast %23 : vector<1x32xf32> to vector<16x32xf32>
    %25 = arith.addf %22, %24 : vector<16x32xf32>
    %c0_10 = arith.constant 0 : index
    %c0_11 = arith.constant 0 : index
    %26 = vector.load %arg4[%c0_10, %c0_11] : memref<32x64xf32, #tpu.memory_space<vmem>>, vector<32x64xf32>
    %cst_12 = arith.constant dense<0.000000e+00> : vector<16x64xf32>
    %27 = tpu.matmul %25, %26, %cst_12 {dimension_numbers = #tpu.dot_dimension_numbers<[1], [0], [0], [1], [0, 0, 1, 1], [], []>} : vector<16x32xf32>, vector<32x64xf32>, vector<16x64xf32> -> vector<16x64xf32>
    %c0_13 = arith.constant 0 : index
    %c0_14 = arith.constant 0 : index
    %28 = vector.load %arg5[%c0_13, %c0_14] : memref<1x64xf32, #tpu.memory_space<vmem>>, vector<1x64xf32>
    %29 = vector.broadcast %28 : vector<1x64xf32> to vector<16x64xf32>
    %30 = arith.addf %27, %29 : vector<16x64xf32>
    %31 = arith.negf %30 : vector<16x64xf32>
    %32 = math.exp %31 : vector<16x64xf32>
    %cst_15 = arith.constant 1.000000e+00 : f32
    %33 = vector.broadcast %cst_15 : f32 to vector<16x64xf32>
    %34 = arith.addf %33, %32 : vector<16x64xf32>
    %35 = arith.divf %33, %34 : vector<16x64xf32>
    %36 = arith.mulf %30, %35 : vector<16x64xf32>
    %cst_16 = arith.constant 0.000000e+00 : f32
    %37 = vector.broadcast %cst_16 : f32 to vector<2x64xf32>
    %38 = tpu.concatenate %37, %36, %37 in 0 : vector<2x64xf32>, vector<16x64xf32>, vector<2x64xf32> -> vector<20x64xf32>
    %39 = vector.extract_strided_slice %38 {offsets = [0, 0], sizes = [16, 64], strides = [1, 1]} : vector<20x64xf32> to vector<16x64xf32>
    %40 = vector.extract_strided_slice %38 {offsets = [1, 0], sizes = [16, 64], strides = [1, 1]} : vector<20x64xf32> to vector<16x64xf32>
    %41 = vector.extract_strided_slice %38 {offsets = [2, 0], sizes = [16, 64], strides = [1, 1]} : vector<20x64xf32> to vector<16x64xf32>
    %42 = vector.extract_strided_slice %38 {offsets = [3, 0], sizes = [16, 64], strides = [1, 1]} : vector<20x64xf32> to vector<16x64xf32>
    %43 = vector.extract_strided_slice %38 {offsets = [4, 0], sizes = [16, 64], strides = [1, 1]} : vector<20x64xf32> to vector<16x64xf32>
    %44 = tpu.concatenate %39, %40, %41, %42, %43 in 1 : vector<16x64xf32>, vector<16x64xf32>, vector<16x64xf32>, vector<16x64xf32>, vector<16x64xf32> -> vector<16x320xf32>
    %c0_17 = arith.constant 0 : index
    %c0_18 = arith.constant 0 : index
    %45 = vector.load %arg6[%c0_17, %c0_18] : memref<320x64xf32, #tpu.memory_space<vmem>>, vector<320x64xf32>
    %cst_19 = arith.constant dense<0.000000e+00> : vector<16x64xf32>
    %46 = tpu.matmul %44, %45, %cst_19 {dimension_numbers = #tpu.dot_dimension_numbers<[1], [0], [0], [1], [0, 0, 1, 1], [], []>} : vector<16x320xf32>, vector<320x64xf32>, vector<16x64xf32> -> vector<16x64xf32>
    %c0_20 = arith.constant 0 : index
    %c0_21 = arith.constant 0 : index
    %47 = vector.load %arg7[%c0_20, %c0_21] : memref<1x64xf32, #tpu.memory_space<vmem>>, vector<1x64xf32>
    %48 = vector.broadcast %47 : vector<1x64xf32> to vector<16x64xf32>
    %49 = arith.addf %46, %48 : vector<16x64xf32>
    %50 = vector.extract_strided_slice %49 {offsets = [0, 0], sizes = [16, 32], strides = [1, 1]} : vector<16x64xf32> to vector<16x32xf32>
    %51 = vector.extract_strided_slice %49 {offsets = [0, 32], sizes = [16, 32], strides = [1, 1]} : vector<16x64xf32> to vector<16x32xf32>
    %52 = arith.negf %51 : vector<16x32xf32>
    %53 = math.exp %52 : vector<16x32xf32>
    %cst_22 = arith.constant 1.000000e+00 : f32
    %54 = vector.broadcast %cst_22 : f32 to vector<16x32xf32>
    %55 = arith.addf %54, %53 : vector<16x32xf32>
    %56 = arith.divf %54, %55 : vector<16x32xf32>
    %57 = arith.mulf %50, %56 : vector<16x32xf32>
    %c0_23 = arith.constant 0 : index
    %c0_24 = arith.constant 0 : index
    %58 = vector.load %arg8[%c0_23, %c0_24] : memref<1x32xf32, #tpu.memory_space<vmem>>, vector<1x32xf32>
    %59 = vector.broadcast %58 : vector<1x32xf32> to vector<16x32xf32>
    %60 = arith.mulf %57, %59 : vector<16x32xf32>
    %c0_25 = arith.constant 0 : index
    %c0_26 = arith.constant 0 : index
    %61 = vector.load %arg9[%c0_25, %c0_26] : memref<1x32xf32, #tpu.memory_space<vmem>>, vector<1x32xf32>
    %62 = vector.broadcast %61 : vector<1x32xf32> to vector<16x32xf32>
    %63 = arith.addf %60, %62 : vector<16x32xf32>
    %c0_27 = arith.constant 0 : index
    %c0_28 = arith.constant 0 : index
    %64 = vector.load %arg10[%c0_27, %c0_28] : memref<32x32xf32, #tpu.memory_space<vmem>>, vector<32x32xf32>
    %cst_29 = arith.constant dense<0.000000e+00> : vector<16x32xf32>
    %65 = tpu.matmul %63, %64, %cst_29 {dimension_numbers = #tpu.dot_dimension_numbers<[1], [0], [0], [1], [0, 0, 1, 1], [], []>} : vector<16x32xf32>, vector<32x32xf32>, vector<16x32xf32> -> vector<16x32xf32>
    %c0_30 = arith.constant 0 : index
    %c0_31 = arith.constant 0 : index
    %66 = vector.load %arg11[%c0_30, %c0_31] : memref<1x32xf32, #tpu.memory_space<vmem>>, vector<1x32xf32>
    %67 = vector.broadcast %66 : vector<1x32xf32> to vector<16x32xf32>
    %68 = arith.addf %65, %67 : vector<16x32xf32>
    %c0_32 = arith.constant 0 : index
    %c0_33 = arith.constant 0 : index
    %c0_34 = arith.constant 0 : index
    %69 = vector.load %arg12[%c0_32, %c0_33, %c0_34] : memref<1x16x32xf32, #tpu.memory_space<vmem>>, vector<1x16x32xf32>
    %70 = vector.shape_cast %69 : vector<1x16x32xf32> to vector<16x32xf32>
    %71 = vector.shape_cast %68 : vector<16x32xf32> to vector<1x16x32xf32>
    tpu.vector_store %arg12[%c0_32, %c0_33, %c0_34], %71 {strides = array<i32>} : memref<1x16x32xf32, #tpu.memory_space<vmem>>, vector<1x16x32xf32>,
    return
  }
  func.func @transform_0(%arg0: i32) -> (i32, i32, i32) {
    %c0_i32 = arith.constant 0 : i32
    %c0_i32_0 = arith.constant 0 : i32
    %c0_i32_1 = arith.constant 0 : i32
    return %arg0, %c0_i32, %c0_i32_0 : i32, i32, i32
  }
  func.func @transform_1(%arg0: i32) -> (i32, i32) {
    %c0_i32 = arith.constant 0 : i32
    %c0_i32_0 = arith.constant 0 : i32
    %c0_i32_1 = arith.constant 0 : i32
    return %c0_i32, %c0_i32_0 : i32, i32
  }
  func.func @transform_2(%arg0: i32) -> (i32, i32) {
    %c0_i32 = arith.constant 0 : i32
    %c0_i32_0 = arith.constant 0 : i32
    %c0_i32_1 = arith.constant 0 : i32
    return %c0_i32, %c0_i32_0 : i32, i32
  }
  func.func @transform_3(%arg0: i32) -> (i32, i32) {
    %c0_i32 = arith.constant 0 : i32
    %c0_i32_0 = arith.constant 0 : i32
    %c0_i32_1 = arith.constant 0 : i32
    return %c0_i32, %c0_i32_0 : i32, i32
  }
  func.func @transform_4(%arg0: i32) -> (i32, i32) {
    %c0_i32 = arith.constant 0 : i32
    %c0_i32_0 = arith.constant 0 : i32
    %c0_i32_1 = arith.constant 0 : i32
    return %c0_i32, %c0_i32_0 : i32, i32
  }
  func.func @transform_5(%arg0: i32) -> (i32, i32) {
    %c0_i32 = arith.constant 0 : i32
    %c0_i32_0 = arith.constant 0 : i32
    %c0_i32_1 = arith.constant 0 : i32
    return %c0_i32, %c0_i32_0 : i32, i32
  }
  func.func @transform_6(%arg0: i32) -> (i32, i32) {
    %c0_i32 = arith.constant 0 : i32
    %c0_i32_0 = arith.constant 0 : i32
    %c0_i32_1 = arith.constant 0 : i32
    return %c0_i32, %c0_i32_0 : i32, i32
  }
  func.func @transform_7(%arg0: i32) -> (i32, i32) {
    %c0_i32 = arith.constant 0 : i32
    %c0_i32_0 = arith.constant 0 : i32
    %c0_i32_1 = arith.constant 0 : i32
    return %c0_i32, %c0_i32_0 : i32, i32
  }
  func.func @transform_8(%arg0: i32) -> (i32, i32) {
    %c0_i32 = arith.constant 0 : i32
    %c0_i32_0 = arith.constant 0 : i32
    %c0_i32_1 = arith.constant 0 : i32
    return %c0_i32, %c0_i32_0 : i32, i32
  }
  func.func @transform_9(%arg0: i32) -> (i32, i32) {
    %c0_i32 = arith.constant 0 : i32
    %c0_i32_0 = arith.constant 0 : i32
    %c0_i32_1 = arith.constant 0 : i32
    return %c0_i32, %c0_i32_0 : i32, i32
  }
  func.func @transform_10(%arg0: i32) -> (i32, i32) {
    %c0_i32 = arith.constant 0 : i32
    %c0_i32_0 = arith.constant 0 : i32
    %c0_i32_1 = arith.constant 0 : i32
    return %c0_i32, %c0_i32_0 : i32, i32
  }
  func.func @transform_11(%arg0: i32) -> (i32, i32, i32) {
    %c0_i32 = arith.constant 0 : i32
    %c0_i32_0 = arith.constant 0 : i32
    %c0_i32_1 = arith.constant 0 : i32
    return %arg0, %c0_i32, %c0_i32_0 : i32, i32, i32
  }
}

</mosaic_0001>

<llo_original>
// kernel: tpu_custom_call.1
$region0: #{tpu_custom_call.1}
  #allocation0 [shape = 'u32[]', space=smem, size = 0x4, offset = 0x4, fixed_abs, tag = 'smem constant byte address 0x4 - core index']
  #allocation1 [shape = 'u32[144,128]{1,0:T(1,128)}', space=vmem, size = 0x12000, scoped, tag = 'internal scratch']
  %s0 = inlined_call_operand.vmem [shape: f32[2,16,32], index: 0, kind: input, shape index: {}]
  %s1 = inlined_call_operand.vmem [shape: f32[1,32], index: 1, kind: input, shape index: {}]
  %s2 = inlined_call_operand.vmem [shape: f32[1,32], index: 2, kind: input, shape index: {}]
  %s3 = inlined_call_operand.vmem [shape: f32[32,64], index: 3, kind: input, shape index: {}]
  %s4 = inlined_call_operand.vmem [shape: f32[1,64], index: 4, kind: input, shape index: {}]
  %s5 = inlined_call_operand.vmem [shape: f32[320,64], index: 5, kind: input, shape index: {}]
  %s6 = inlined_call_operand.vmem [shape: f32[1,64], index: 6, kind: input, shape index: {}]
  %s7 = inlined_call_operand.vmem [shape: f32[1,32], index: 7, kind: input, shape index: {}]
  %s8 = inlined_call_operand.vmem [shape: f32[1,32], index: 8, kind: input, shape index: {}]
  %s9 = inlined_call_operand.vmem [shape: f32[32,32], index: 9, kind: input, shape index: {}]
  %s10 = inlined_call_operand.vmem [shape: f32[1,32], index: 10, kind: input, shape index: {}]
  %s11 = inlined_call_operand.hbm [shape: f32[2,16,32], index: 11, kind: output, shape index: {}]
  %s12 = sld [smem:[#allocation0]]
  $region77: #{tpu_custom_call.1} parent=0
    _
  %s14 = ssub.s32 1, %s12
  %s15 = scalar_select 0, %s14, %s12
  $region1: #{tpu_custom_call.1} parent=0
    #allocation2 [shape = 'u8[16384]{0}', space=vmem, size = 0x4000, scoped, tag = 'output window, operand 0']
    #allocation3 [shape = 's32[2]{0}', space=sflag, size = 0x8, scoped, tag = 'scoped memory for tpu_custom_call.1']
    %16 = vsyncpa [#allocation3], 0
    %s17 = scalar_lea.sflag [#allocation3], 1
    %18 = vsyncpa %s17, 0
    loop: start=0, step=1, limit=4
    $region2: #{tpu_custom_call.1} parent=1 // loop_pre_header
      _
    $region3: #{tpu_custom_call.1} parent=1 // loop_header
      %s20 = sphi 0, %s24
      %p21 = scmp.ge.s32.totalorder %s20, 4
      %s30 = sphi 0, %s32
      %s33 = sphi 0, %s30
      %s34 = sphi 0, %s33
      %s50 = sphi 0, %s34
      %s54 = sphi 0, %s54
      %s56 = sphi 0, %s54
      %s57 = sphi 0, %s56
      %s71 = sphi 0, %s57
      %s75 = sphi 0, %s75
      %s77 = sphi 0, %s75
      %s78 = sphi 0, %s77
      %s92 = sphi 0, %s78
      %s96 = sphi 0, %s96
      %s98 = sphi 0, %s96
      %s99 = sphi 0, %s98
      %s113 = sphi 0, %s99
      %s117 = sphi 0, %s117
      %s119 = sphi 0, %s117
      %s120 = sphi 0, %s119
      %s134 = sphi 0, %s120
      %s138 = sphi 0, %s138
      %s140 = sphi 0, %s138
      %s141 = sphi 0, %s140
      %s155 = sphi 0, %s141
      %s159 = sphi 0, %s159
      %s161 = sphi 0, %s159
      %s162 = sphi 0, %s161
      %s176 = sphi 0, %s162
      %s180 = sphi 0, %s180
      %s182 = sphi 0, %s180
      %s183 = sphi 0, %s182
      %s197 = sphi 0, %s183
      %s201 = sphi 0, %s201
      %s203 = sphi 0, %s201
      %s204 = sphi 0, %s203
      %s218 = sphi 0, %s204
      %s222 = sphi 0, %s222
      %s224 = sphi 0, %s222
      %s225 = sphi 0, %s224
      %s239 = sphi 0, %s225
      %s243 = sphi 0, %s243
      %s245 = sphi 0, %s243
      %s246 = sphi 0, %s245
      %s260 = sphi 0, %s246
      %s266 = sphi 0, %s268
      %s269 = sphi 0, %s266
      %s270 = sphi 0, %s269
      %s286 = sphi 0, %s270
    $region4: #{tpu_custom_call.1} parent=1 // loop_header_branch
      %23 = sbr.rel (%p21) target = $region8
    $region5: #{tpu_custom_call.1} parent=1 // loop_body
      %s25 = ssub.s32 %s20, 1
      %s26 = ssub.s32 %s20, 2
      %s27 = sadd.s32 %s20, 1
      %s28 = ssub.s32 %s20, %s27
      %p29 = scmp.eq.s32.totalorder %s28, 0
      %s31 = sadd.s32 %s30, 1
      %s32 = scalar_select %p29, %s30, %s31
      %p35 = pneg %p29
      %p36 = scmp.eq.s32.totalorder %s20, 1
      %p37 = por %p35, %p36
      %p38 = scmp.ne.s32.totalorder %s30, %s33
      %p39 = scmp.eq.s32.totalorder %s20, 0
      %p40 = por %p38, %p39
      %p41 = scmp.ne.s32.totalorder %s30, %s33
      %p42 = scmp.eq.s32.totalorder %s25, 1
      %p43 = por %p41, %p42
      %p44 = scmp.ne.s32.totalorder %s33, %s34
      %p45 = scmp.eq.s32.totalorder %s25, 0
      %p46 = por %p44, %p45
      %p47 = scmp.ne.s32.totalorder %s33, %s34
      %p48 = scmp.eq.s32.totalorder %s26, 1
      %p49 = por %p47, %p48
      %p51 = scmp.ne.s32.totalorder %s34, %s50
      %p52 = scmp.eq.s32.totalorder %s26, 0
      %p53 = por %p51, %p52
      %s55 = sadd.s32 %s54, 1
      %p58 = scmp.eq.s32.totalorder %s20, 1
      %p59 = scmp.ne.s32.totalorder %s54, %s56
      %p60 = scmp.eq.s32.totalorder %s20, 0
      %p61 = por %p59, %p60
      %p62 = scmp.ne.s32.totalorder %s54, %s56
      %p63 = scmp.eq.s32.totalorder %s25, 1
      %p64 = por %p62, %p63
      %p65 = scmp.ne.s32.totalorder %s56, %s57
      %p66 = scmp.eq.s32.totalorder %s25, 0
      %p67 = por %p65, %p66
      %p68 = scmp.ne.s32.totalorder %s56, %s57
      %p69 = scmp.eq.s32.totalorder %s26, 1
      %p70 = por %p68, %p69
      %p72 = scmp.ne.s32.totalorder %s57, %s71
      %p73 = scmp.eq.s32.totalorder %s26, 0
      %p74 = por %p72, %p73
      %s76 = sadd.s32 %s75, 1
      %p79 = scmp.eq.s32.totalorder %s20, 1
      %p80 = scmp.ne.s32.totalorder %s75, %s77
      %p81 = scmp.eq.s32.totalorder %s20, 0
      %p82 = por %p80, %p81
      %p83 = scmp.ne.s32.totalorder %s75, %s77
      %p84 = scmp.eq.s32.totalorder %s25, 1
      %p85 = por %p83, %p84
      %p86 = scmp.ne.s32.totalorder %s77, %s78
      %p87 = scmp.eq.s32.totalorder %s25, 0
      %p88 = por %p86, %p87
      %p89 = scmp.ne.s32.totalorder %s77, %s78
      %p90 = scmp.eq.s32.totalorder %s26, 1
      %p91 = por %p89, %p90
      %p93 = scmp.ne.s32.totalorder %s78, %s92
      %p94 = scmp.eq.s32.totalorder %s26, 0
      %p95 = por %p93, %p94
      %s97 = sadd.s32 %s96, 1
      %p100 = scmp.eq.s32.totalorder %s20, 1
      %p101 = scmp.ne.s32.totalorder %s96, %s98
      %p102 = scmp.eq.s32.totalorder %s20, 0
      %p103 = por %p101, %p102
      %p104 = scmp.ne.s32.totalorder %s96, %s98
      %p105 = scmp.eq.s32.totalorder %s25, 1
      %p106 = por %p104, %p105
      %p107 = scmp.ne.s32.totalorder %s98, %s99
      %p108 = scmp.eq.s32.totalorder %s25, 0
      %p109 = por %p107, %p108
      %p110 = scmp.ne.s32.totalorder %s98, %s99
      %p111 = scmp.eq.s32.totalorder %s26, 1
      %p112 = por %p110, %p111
      %p114 = scmp.ne.s32.totalorder %s99, %s113
      %p115 = scmp.eq.s32.totalorder %s26, 0
      %p116 = por %p114, %p115
      %s118 = sadd.s32 %s117, 1
      %p121 = scmp.eq.s32.totalorder %s20, 1
      %p122 = scmp.ne.s32.totalorder %s117, %s119
      %p123 = scmp.eq.s32.totalorder %s20, 0
      %p124 = por %p122, %p123
      %p125 = scmp.ne.s32.totalorder %s117, %s119
      %p126 = scmp.eq.s32.totalorder %s25, 1
      %p127 = por %p125, %p126
      %p128 = scmp.ne.s32.totalorder %s119, %s120
      %p129 = scmp.eq.s32.totalorder %s25, 0
      %p130 = por %p128, %p129
      %p131 = scmp.ne.s32.totalorder %s119, %s120
      %p132 = scmp.eq.s32.totalorder %s26, 1
      %p133 = por %p131, %p132
      %p135 = scmp.ne.s32.totalorder %s120, %s134
      %p136 = scmp.eq.s32.totalorder %s26, 0
      %p137 = por %p135, %p136
      %s139 = sadd.s32 %s138, 1
      %p142 = scmp.eq.s32.totalorder %s20, 1
      %p143 = scmp.ne.s32.totalorder %s138, %s140
      %p144 = scmp.eq.s32.totalorder %s20, 0
      %p145 = por %p143, %p144
      %p146 = scmp.ne.s32.totalorder %s138, %s140
      %p147 = scmp.eq.s32.totalorder %s25, 1
      %p148 = por %p146, %p147
      %p149 = scmp.ne.s32.totalorder %s140, %s141
      %p150 = scmp.eq.s32.totalorder %s25, 0
      %p151 = por %p149, %p150
      %p152 = scmp.ne.s32.totalorder %s140, %s141
      %p153 = scmp.eq.s32.totalorder %s26, 1
      %p154 = por %p152, %p153
      %p156 = scmp.ne.s32.totalorder %s141, %s155
      %p157 = scmp.eq.s32.totalorder %s26, 0
      %p158 = por %p156, %p157
      %s160 = sadd.s32 %s159, 1
      %p163 = scmp.eq.s32.totalorder %s20, 1
      %p164 = scmp.ne.s32.totalorder %s159, %s161
      %p165 = scmp.eq.s32.totalorder %s20, 0
      %p166 = por %p164, %p165
      %p167 = scmp.ne.s32.totalorder %s159, %s161
      %p168 = scmp.eq.s32.totalorder %s25, 1
      %p169 = por %p167, %p168
      %p170 = scmp.ne.s32.totalorder %s161, %s162
      %p171 = scmp.eq.s32.totalorder %s25, 0
      %p172 = por %p170, %p171
      %p173 = scmp.ne.s32.totalorder %s161, %s162
      %p174 = scmp.eq.s32.totalorder %s26, 1
      %p175 = por %p173, %p174
      %p177 = scmp.ne.s32.totalorder %s162, %s176
      %p178 = scmp.eq.s32.totalorder %s26, 0
      %p179 = por %p177, %p178
      %s181 = sadd.s32 %s180, 1
      %p184 = scmp.eq.s32.totalorder %s20, 1
      %p185 = scmp.ne.s32.totalorder %s180, %s182
      %p186 = scmp.eq.s32.totalorder %s20, 0
      %p187 = por %p185, %p186
      %p188 = scmp.ne.s32.totalorder %s180, %s182
      %p189 = scmp.eq.s32.totalorder %s25, 1
      %p190 = por %p188, %p189
      %p191 = scmp.ne.s32.totalorder %s182, %s183
      %p192 = scmp.eq.s32.totalorder %s25, 0
      %p193 = por %p191, %p192
      %p194 = scmp.ne.s32.totalorder %s182, %s183
      %p195 = scmp.eq.s32.totalorder %s26, 1
      %p196 = por %p194, %p195
      %p198 = scmp.ne.s32.totalorder %s183, %s197
      %p199 = scmp.eq.s32.totalorder %s26, 0
      %p200 = por %p198, %p199
      %s202 = sadd.s32 %s201, 1
      %p205 = scmp.eq.s32.totalorder %s20, 1
      %p206 = scmp.ne.s32.totalorder %s201, %s203
      %p207 = scmp.eq.s32.totalorder %s20, 0
      %p208 = por %p206, %p207
      %p209 = scmp.ne.s32.totalorder %s201, %s203
      %p210 = scmp.eq.s32.totalorder %s25, 1
      %p211 = por %p209, %p210
      %p212 = scmp.ne.s32.totalorder %s203, %s204
      %p213 = scmp.eq.s32.totalorder %s25, 0
      %p214 = por %p212, %p213
      %p215 = scmp.ne.s32.totalorder %s203, %s204
      %p216 = scmp.eq.s32.totalorder %s26, 1
      %p217 = por %p215, %p216
      %p219 = scmp.ne.s32.totalorder %s204, %s218
      %p220 = scmp.eq.s32.totalorder %s26, 0
      %p221 = por %p219, %p220
      %s223 = sadd.s32 %s222, 1
      %p226 = scmp.eq.s32.totalorder %s20, 1
      %p227 = scmp.ne.s32.totalorder %s222, %s224
      %p228 = scmp.eq.s32.totalorder %s20, 0
      %p229 = por %p227, %p228
      %p230 = scmp.ne.s32.totalorder %s222, %s224
      %p231 = scmp.eq.s32.totalorder %s25, 1
      %p232 = por %p230, %p231
      %p233 = scmp.ne.s32.totalorder %s224, %s225
      %p234 = scmp.eq.s32.totalorder %s25, 0
      %p235 = por %p233, %p234
      %p236 = scmp.ne.s32.totalorder %s224, %s225
      %p237 = scmp.eq.s32.totalorder %s26, 1
      %p238 = por %p236, %p237
      %p240 = scmp.ne.s32.totalorder %s225, %s239
      %p241 = scmp.eq.s32.totalorder %s26, 0
      %p242 = por %p240, %p241
      %s244 = sadd.s32 %s243, 1
      %p247 = scmp.eq.s32.totalorder %s20, 1
      %p248 = scmp.ne.s32.totalorder %s243, %s245
      %p249 = scmp.eq.s32.totalorder %s20, 0
      %p250 = por %p248, %p249
      %p251 = scmp.ne.s32.totalorder %s243, %s245
      %p252 = scmp.eq.s32.totalorder %s25, 1
      %p253 = por %p251, %p252
      %p254 = scmp.ne.s32.totalorder %s245, %s246
      %p255 = scmp.eq.s32.totalorder %s25, 0
      %p256 = por %p254, %p255
      %p257 = scmp.ne.s32.totalorder %s245, %s246
      %p258 = scmp.eq.s32.totalorder %s26, 1
      %p259 = por %p257, %p258
      %p261 = scmp.ne.s32.totalorder %s246, %s260
      %p262 = scmp.eq.s32.totalorder %s26, 0
      %p263 = por %p261, %p262
      %s264 = ssub.s32 %s20, %s27
      %p265 = scmp.eq.s32.totalorder %s264, 0
      %s267 = sadd.s32 %s266, 1
      %s268 = scalar_select %p265, %s266, %s267
      %p271 = pneg %p265
      %p272 = scmp.eq.s32.totalorder %s20, 1
      %p273 = por %p271, %p272
      %p274 = scmp.ne.s32.totalorder %s266, %s269
      %p275 = scmp.eq.s32.totalorder %s20, 0
      %p276 = por %p274, %p275
      %p277 = scmp.ne.s32.totalorder %s266, %s269
      %p278 = scmp.eq.s32.totalorder %s25, 1
      %p279 = por %p277, %p278
      %p280 = scmp.ne.s32.totalorder %s269, %s270
      %p281 = scmp.eq.s32.totalorder %s25, 0
      %p282 = por %p280, %p281
      %p283 = scmp.ne.s32.totalorder %s269, %s270
      %p284 = scmp.eq.s32.totalorder %s26, 1
      %p285 = por %p283, %p284
      %p287 = scmp.ne.s32.totalorder %s270, %s286
      %p288 = scmp.eq.s32.totalorder %s26, 0
      %p289 = por %p287, %p288
      %p290 = scmp.le.s32.totalorder 1, %s20
      %p291 = scmp.lt.s32.totalorder %s20, 3
      %p292 = pnand %p290, %p291
      %p293 = pneg %p292
      // Predicated region
      $region9: #{tpu_custom_call.1} parent=5 // pred_check
        _
      $region10: #{tpu_custom_call.1} parent=5 // pred_check_branch
        %295 = sbr.rel (%p292) target = $region12
      $region11: #{tpu_custom_call.1} parent=5 // pred_region
        %s296 = ssub.s32 %s20, 1
        // Predicated region
        $region13: #{tpu_custom_call.1} parent=11 // pred_check
          %p297 = pneg %p67
        $region14: #{tpu_custom_call.1} parent=11 // pred_check_branch
          %299 = sbr.rel (%p297) target = $region16
        $region15: #{tpu_custom_call.1} parent=11 // pred_region
          _
        $region16: #{tpu_custom_call.1} parent=11 // pred_fallthru
          _
        // Predicated region
        $region17: #{tpu_custom_call.1} parent=11 // pred_check
          %p300 = pneg %p88
        $region18: #{tpu_custom_call.1} parent=11 // pred_check_branch
          %302 = sbr.rel (%p300) target = $region20
        $region19: #{tpu_custom_call.1} parent=11 // pred_region
          _
        $region20: #{tpu_custom_call.1} parent=11 // pred_fallthru
          _
        // Predicated region
        $region21: #{tpu_custom_call.1} parent=11 // pred_check
          %p303 = pneg %p109
        $region22: #{tpu_custom_call.1} parent=11 // pred_check_branch
          %305 = sbr.rel (%p303) target = $region24
        $region23: #{tpu_custom_call.1} parent=11 // pred_region
          _
        $region24: #{tpu_custom_call.1} parent=11 // pred_fallthru
          _
        // Predicated region
        $region25: #{tpu_custom_call.1} parent=11 // pred_check
          %p306 = pneg %p130
        $region26: #{tpu_custom_call.1} parent=11 // pred_check_branch
          %308 = sbr.rel (%p306) target = $region28
        $region27: #{tpu_custom_call.1} parent=11 // pred_region
          _
        $region28: #{tpu_custom_call.1} parent=11 // pred_fallthru
          _
        // Predicated region
        $region29: #{tpu_custom_call.1} parent=11 // pred_check
          %p309 = pneg %p151
        $region30: #{tpu_custom_call.1} parent=11 // pred_check_branch
          %311 = sbr.rel (%p309) target = $region32
        $region31: #{tpu_custom_call.1} parent=11 // pred_region
          _
        $region32: #{tpu_custom_call.1} parent=11 // pred_fallthru
          _
        // Predicated region
        $region33: #{tpu_custom_call.1} parent=11 // pred_check
          %p312 = pneg %p172
        $region34: #{tpu_custom_call.1} parent=11 // pred_check_branch
          %314 = sbr.rel (%p312) target = $region36
        $region35: #{tpu_custom_call.1} parent=11 // pred_region
          _
        $region36: #{tpu_custom_call.1} parent=11 // pred_fallthru
          _
        // Predicated region
        $region37: #{tpu_custom_call.1} parent=11 // pred_check
          %p315 = pneg %p193
        $region38: #{tpu_custom_call.1} parent=11 // pred_check_branch
          %317 = sbr.rel (%p315) target = $region40
        $region39: #{tpu_custom_call.1} parent=11 // pred_region
          _
        $region40: #{tpu_custom_call.1} parent=11 // pred_fallthru
          _
        // Predicated region
        $region41: #{tpu_custom_call.1} parent=11 // pred_check
          %p318 = pneg %p214
        $region42: #{tpu_custom_call.1} parent=11 // pred_check_branch
          %320 = sbr.rel (%p318) target = $region44
        $region43: #{tpu_custom_call.1} parent=11 // pred_region
          _
        $region44: #{tpu_custom_call.1} parent=11 // pred_fallthru
          _
        // Predicated region
        $region45: #{tpu_custom_call.1} parent=11 // pred_check
          %p321 = pneg %p235
        $region46: #{tpu_custom_call.1} parent=11 // pred_check_branch
          %323 = sbr.rel (%p321) target = $region48
        $region47: #{tpu_custom_call.1} parent=11 // pred_region
          _
        $region48: #{tpu_custom_call.1} parent=11 // pred_fallthru
          _
        // Predicated region
        $region49: #{tpu_custom_call.1} parent=11 // pred_check
          %p324 = pneg %p256
        $region50: #{tpu_custom_call.1} parent=11 // pred_check_branch
          %326 = sbr.rel (%p324) target = $region52
        $region51: #{tpu_custom_call.1} parent=11 // pred_region
          _
        $region52: #{tpu_custom_call.1} parent=11 // pred_fallthru
          _
      $region12: #{tpu_custom_call.1} parent=5 // pred_fallthru
        _
      %p327 = scmp.lt.s32.totalorder %s20, 2
      // Predicated region
      $region53: #{tpu_custom_call.1} parent=5 // pred_check
        %p328 = pneg %p327
      $region54: #{tpu_custom_call.1} parent=5 // pred_check_branch
        %330 = sbr.rel (%p328) target = $region56
      $region55: #{tpu_custom_call.1} parent=5 // pred_region
        // Predicated region
        $region57: #{tpu_custom_call.1} parent=55 // pred_check
          %p331 = pneg %p40
        $region58: #{tpu_custom_call.1} parent=55 // pred_check_branch
          %333 = sbr.rel (%p331) target = $region60
        $region59: #{tpu_custom_call.1} parent=55 // pred_region
          %p334 = scmp.lt.s32.totalorder %s20, 1
          %s335 = scalar_select %p334, %s20, 1
          %s336 = smul.addr %s335, 2
          %s337 = smul.addr %s336, 8
          %s338 = scalar_lea.vmem %s0, %s337
        $region60: #{tpu_custom_call.1} parent=55 // pred_fallthru
          _
      $region56: #{tpu_custom_call.1} parent=5 // pred_fallthru
        _
      %p339 = scmp.le.s32.totalorder 1, %s20
      %p340 = scmp.lt.s32.totalorder %s20, 3
      %p341 = pnand %p339, %p340
      %p342 = pneg %p341
      // Predicated region
      $region61: #{tpu_custom_call.1} parent=5 // pred_check
        _
      $region62: #{tpu_custom_call.1} parent=5 // pred_check_branch
        %344 = sbr.rel (%p341) target = $region64
      $region63: #{tpu_custom_call.1} parent=5 // pred_region
        %s345 = ssub.s32 %s20, 1
        %p346 = scmp.lt.s32.totalorder %s25, 1
        %s347 = scalar_select %p346, %s25, 1
        %s348 = smul.addr %s347, 2
        %s349 = smul.addr %s348, 8
        %s350 = scalar_lea.vmem %s0, %s349
        %p351 = pneg %p46
        %p352 = pneg %p43
        %p353 = pneg %p67
        %p354 = pneg %p64
        %p355 = pneg %p88
        %p356 = pneg %p85
        %p357 = pneg %p109
        %p358 = pneg %p106
        %p359 = pneg %p130
        %p360 = pneg %p127
        %p361 = pneg %p151
        %p362 = pneg %p148
        %p363 = pneg %p172
        %p364 = pneg %p169
        %p365 = pneg %p193
        %p366 = pneg %p190
        %p367 = pneg %p214
        %p368 = pneg %p211
        %p369 = pneg %p235
        %p370 = pneg %p232
        %p371 = pneg %p256
        %p372 = pneg %p253
        %p373 = pneg %p282
        %p374 = pneg %p279
        %s375 = sand.u32 %s269, 1
        %s376 = scalar_lea.sflag [#allocation3], %s375
        %s377 = sand.u32 %s269, 1
        %s378 = smul.addr %s377, 16
        %s379 = scalar_lea.vmem [#allocation2], %s378
        %p380 = scmp.lt.s32.totalorder %s25, 1
        %s381 = scalar_select %p380, %s25, 1
        %s382 = smul.addr %s381, 2
        %s383 = smul.addr %s382, 8
        %s384 = scalar_lea.vmem %s0, %s383
        %v385 = vld [vmem:[%s384] sm:$0xff]
        %v386 = vld [vmem:[%s384 + $0x8] sm:$0xff]
        %vm387 = vcmask 261120
        %v388 = vsel %vm387, %v385, 0.0
        %389 = vadd.xlane.f32.xlu0 %v388
        %v390 = vpop.xlane.xlu0 %389
        %v391 = vsel %vm387, %v386, 0.0
        %392 = vadd.xlane.f32.xlu0 %v391
        %v393 = vpop.xlane.xlu0 %392
        %v394 = vrcp.pop 32.0
        %v395 = vmul.f32 %v390, %v394
        %v396 = vmul.f32 %v393, %v394
        %v397 = vsub.f32 %v385, %v395
        %v398 = vsub.f32 %v386, %v396
        %v399 = vmul.f32 %v397, %v397
        %v400 = vmul.f32 %v398, %v398
        %v401 = vsel %vm387, %v399, 0.0
        %402 = vadd.xlane.f32.xlu0 %v401
        %v403 = vpop.xlane.xlu0 %402
        %v404 = vsel %vm387, %v400, 0.0
        %405 = vadd.xlane.f32.xlu0 %v404
        %v406 = vpop.xlane.xlu0 %405
        %v407 = vmul.f32 %v403, %v394
        %v408 = vmul.f32 %v406, %v394
        %v409 = vadd.f32 %v407, 1e-05
        %v410 = vadd.f32 %v408, 1e-05
        %v411 = vrsqrt.pop %v409
        %v412 = vrsqrt.pop %v410
        %v413 = vmul.f32 %v397, %v411
        %v414 = vmul.f32 %v398, %v412
        %v415 = vld [vmem:[%s1] sm:$0x1]
        %v417 = vlaneseq
        %v418 = vshrl.u32 %v417, 7
        %v419 = vsub.s32 0, %v418
        %v420 = vrot.slane %v415, %v419
        %v422 = vmul.f32 %v413, %v420
        %v423 = vmul.f32 %v414, %v420
        %v424 = vld [vmem:[%s2] sm:$0x1]
        %v426 = vlaneseq
        %v427 = vshrl.u32 %v426, 7
        %v428 = vsub.s32 0, %v427
        %v429 = vrot.slane %v424, %v428
        %v431 = vadd.f32 %v422, %v429
        %v432 = vadd.f32 %v423, %v429
        %v433 = vld [vmem:[%s3] sm:$0xff]
        %v434 = vld [vmem:[%s3 + $0x8] sm:$0xff]
        %v435 = vld [vmem:[%s3 + $0x10] sm:$0xff]
        %v436 = vld [vmem:[%s3 + $0x18] sm:$0xff]
        %v437 = vld [vmem:[%s4] sm:$0x1]
        %v439 = vlaneseq
        %v440 = vshrl.u32 %v439, 7
        %v441 = vsub.s32 0, %v440
        %v442 = vrot.slane %v437, %v441
        %v445 = vsel %vm387, %v431, 0
        %v448 = vsel %vm387, %v432, 0
        %450 = vmatprep.subr.mxu0 0.0
        %451 = vmatpush1.msra.mxu0 %v433
        %452 = vmatprep.subr.mxu0 0.0
        %453 = vmatpush1.msra.mxu0 %v434
        %454 = vmatprep.subr.mxu0 0.0
        %455 = vmatpush1.msra.mxu0 %v435
        %456 = vmatprep.subr.mxu0 0.0
        %457 = vmatpush1.msra.mxu0 %v436
        %458 = vmatprep.subr.mxu0 0.0
        %459 = vmatpush1.msra.mxu0 0.0
        %460 = vmatprep.subr.mxu0 0.0
        %461 = vmatpush1.msra.mxu0 0.0
        %462 = vmatprep.subr.mxu0 0.0
        %463 = vmatpush1.msra.mxu0 0.0
        %464 = vmatprep.subr.mxu0 0.0
        %465 = vmatpush1.msra.mxu0 0.0
        %466 = vmatprep.subr.mxu0 0.0
        %467 = vmatpush1.msra.mxu0 0.0
        %468 = vmatprep.subr.mxu0 0.0
        %469 = vmatpush1.msra.mxu0 0.0
        %470 = vmatprep.subr.mxu0 0.0
        %471 = vmatpush1.msra.mxu0 0.0
        %472 = vmatprep.subr.mxu0 0.0
        %473 = vmatpush1.msra.mxu0 0.0
        %474 = vmatprep.subr.mxu0 0.0
        %475 = vmatpush1.msra.mxu0 0.0
        %476 = vmatprep.subr.mxu0 0.0
        %477 = vmatpush1.msra.mxu0 0.0
        %478 = vmatprep.subr.mxu0 0.0
        %479 = vmatpush1.msra.mxu0 0.0
        %480 = vmatprep.subr.mxu0 0.0
        %481 = vmatpush1.msra.mxu0 0.0
        %482 = vmatprep.subr.mxu0 0.0
        %483 = vmatpush1.msra.mxu0 0.0
        %484 = vmatprep.subr.mxu0 0.0
        %485 = vmatpush1.msra.mxu0 0.0
        %486 = vmatprep.subr.mxu0 0.0
        %487 = vmatpush1.msra.mxu0 0.0
        %488 = vmatprep.subr.mxu0 0.0
        %489 = vmatpush1.msra.mxu0 0.0
        %490 = vmatprep.subr.mxu0 0.0
        %491 = vmatpush1.msra.mxu0 0.0
        %492 = vmatprep.subr.mxu0 0.0
        %493 = vmatpush1.msra.mxu0 0.0
        %494 = vmatprep.subr.mxu0 0.0
        %495 = vmatpush1.msra.mxu0 0.0
        %496 = vmatprep.subr.mxu0 0.0
        %497 = vmatpush1.msra.mxu0 0.0
        %498 = vmatprep.subr.mxu0 0.0
        %499 = vmatpush1.msra.mxu0 0.0
        %500 = vmatprep.subr.mxu0 0.0
        %501 = vmatpush1.msra.mxu0 0.0
        %502 = vmatprep.subr.mxu0 0.0
        %503 = vmatpush1.msra.mxu0 0.0
        %504 = vmatprep.subr.mxu0 0.0
        %505 = vmatpush1.msra.mxu0 0.0
        %506 = vmatprep.subr.mxu0 0.0
        %507 = vmatpush1.msra.mxu0 0.0
        %508 = vmatprep.subr.mxu0 0.0
        %509 = vmatpush1.msra.mxu0 0.0
        %510 = vmatprep.subr.mxu0 0.0
        %511 = vmatpush1.msra.mxu0 0.0
        %512 = vmatprep.subr.mxu0 0.0
        %513 = vmatpush1.msra.mxu0 0.0
        %514 = vmatprep.mubr.f32.mxu0 0.0
        %515 = vmatmul.mubr.f32.gmra.mrb[0].mxu0 %v445
        %v516 = vpop.f32.mrb[0].mxu0
        %v517 = vadd.f32 %v442, %v516
        %v518 = vpop.f32.mrb[0].mxu0
        %519 = vmatprep.mubr.f32.mxu0 0.0
        %520 = vmatmul.mubr.f32.gmra.mrb[0].mxu0 %v448
        %v521 = vpop.f32.mrb[0].mxu0
        %v522 = vadd.f32 %v442, %v521
        %v523 = vpop.f32.mrb[0].mxu0
        %524 = vdwg.mxu0
        %v525 = vxor.u32 %v517, 2147483648
        %v526 = vxor.u32 %v522, 2147483648
        %v527 = vmul.f32 %v525, 1.442695
        %v528 = vpow.pop %v527
        %v529 = vmul.f32 %v526, 1.442695
        %v530 = vpow.pop %v529
        %v531 = vadd.f32 %v528, 1.0
        %v532 = vadd.f32 %v530, 1.0
        %v533 = vrcp.pop %v531
        %v534 = vmul.f32 1.0, %v533
        %v535 = vrcp.pop %v532
        %v536 = vmul.f32 1.0, %v535
        %v537 = vmul.f32 %v517, %v534
        %v538 = vmul.f32 %v522, %v536
        %vm541 = vcmask 1041408
        %v542 = vrot.slane %v537, 6
        %v543 = vrot.slane %v538, 6
        %v544 = vsel %vm541, %v542, %v543
        %v548 = vsel %vm541, 0.0, %v542
        %v549 = vsel %vm541, %v543, 0.0
        %vm552 = vcmask 1046528
        %v553 = vrot.slane %v548, 1
        %v554 = vrot.slane %v544, 1
        %v555 = vsel %vm552, %v553, %v554
        %v556 = vrot.slane %v549, 1
        %v557 = vsel %vm552, %v554, %v556
        %558 = vrot.lane.b32.xlu0 %v555, 64
        %v559 = vpop.permute.xlu0 %558
        %560 = vrot.lane.b32.xlu0 %v557, 64
        %v561 = vpop.permute.xlu0 %560
        %vm564 = vcmask 1045504
        %v565 = vrot.slane %v548, 2
        %v566 = vrot.slane %v544, 2
        %v567 = vsel %vm564, %v565, %v566
        %v568 = vrot.slane %v549, 2
        %v569 = vsel %vm564, %v566, %v568
        %vm572 = vcmask 1044480
        %v573 = vrot.slane %v548, 3
        %v574 = vrot.slane %v544, 3
        %v575 = vsel %vm572, %v573, %v574
        %v576 = vrot.slane %v549, 3
        %v577 = vsel %vm572, %v574, %v576
        %578 = vrot.lane.b32.xlu0 %v575, 64
        %v579 = vpop.permute.xlu0 %578
        %580 = vrot.lane.b32.xlu0 %v577, 64
        %v581 = vpop.permute.xlu0 %580
        %vm584 = vcmask 1043456
        %v585 = vrot.slane %v548, 4
        %v586 = vrot.slane %v544, 4
        %v587 = vsel %vm584, %v585, %v586
        %v588 = vrot.slane %v549, 4
        %v589 = vsel %vm584, %v586, %v588
        %vm590 = vcmask 523264
        %v591 = vsel %vm590, %v548, %v559
        %v592 = vsel %vm590, %v544, %v561
        %v593 = vsel %vm590, %v567, %v579
        %v594 = vsel %vm590, %v569, %v581
        %v595 = vld [vmem:[%s5] sm:$0xff]
        %v596 = vld [vmem:[%s5 + $0x8] sm:$0xff]
        %v597 = vld [vmem:[%s5 + $0x10] sm:$0xff]
        %v598 = vld [vmem:[%s5 + $0x18] sm:$0xff]
        %v599 = vld [vmem:[%s5 + $0x20] sm:$0xff]
        %v600 = vld [vmem:[%s5 + $0x28] sm:$0xff]
        %v601 = vld [vmem:[%s5 + $0x30] sm:$0xff]
        %v602 = vld [vmem:[%s5 + $0x38] sm:$0xff]
        %v603 = vld [vmem:[%s5 + $0x40] sm:$0xff]
        %v604 = vld [vmem:[%s5 + $0x48] sm:$0xff]
        %v605 = vld [vmem:[%s5 + $0x50] sm:$0xff]
        %v606 = vld [vmem:[%s5 + $0x58] sm:$0xff]
        %v607 = vld [vmem:[%s5 + $0x60] sm:$0xff]
        %v608 = vld [vmem:[%s5 + $0x68] sm:$0xff]
        %v609 = vld [vmem:[%s5 + $0x70] sm:$0xff]
        %v610 = vld [vmem:[%s5 + $0x78] sm:$0xff]
        %v611 = vld [vmem:[%s5 + $0x80] sm:$0xff]
        %v612 = vld [vmem:[%s5 + $0x88] sm:$0xff]
        %v613 = vld [vmem:[%s5 + $0x90] sm:$0xff]
        %v614 = vld [vmem:[%s5 + $0x98] sm:$0xff]
        %v615 = vld [vmem:[%s5 + $0xa0] sm:$0xff]
        %v616 = vld [vmem:[%s5 + $0xa8] sm:$0xff]
        %v617 = vld [vmem:[%s5 + $0xb0] sm:$0xff]
        %v618 = vld [vmem:[%s5 + $0xb8] sm:$0xff]
        %v619 = vld [vmem:[%s5 + $0xc0] sm:$0xff]
        %v620 = vld [vmem:[%s5 + $0xc8] sm:$0xff]
        %v621 = vld [vmem:[%s5 + $0xd0] sm:$0xff]
        %v622 = vld [vmem:[%s5 + $0xd8] sm:$0xff]
        %v623 = vld [vmem:[%s5 + $0xe0] sm:$0xff]
        %v624 = vld [vmem:[%s5 + $0xe8] sm:$0xff]
        %v625 = vld [vmem:[%s5 + $0xf0] sm:$0xff]
        %v626 = vld [vmem:[%s5 + $0xf8] sm:$0xff]
        %v627 = vld [vmem:[%s5 + $0x100] sm:$0xff]
        %v628 = vld [vmem:[%s5 + $0x108] sm:$0xff]
        %v629 = vld [vmem:[%s5 + $0x110] sm:$0xff]
        %v630 = vld [vmem:[%s5 + $0x118] sm:$0xff]
        %v631 = vld [vmem:[%s5 + $0x120] sm:$0xff]
        %v632 = vld [vmem:[%s5 + $0x128] sm:$0xff]
        %v633 = vld [vmem:[%s5 + $0x130] sm:$0xff]
        %v634 = vld [vmem:[%s5 + $0x138] sm:$0xff]
        %v635 = vld [vmem:[%s6] sm:$0x1]
        %v637 = vlaneseq
        %v638 = vshrl.u32 %v637, 7
        %v639 = vsub.s32 0, %v638
        %v640 = vrot.slane %v635, %v639
        %v642 = vsel %vm590, %v587, 0
        %v644 = vsel %vm590, %v589, 0
        %646 = vmatprep.subr.mxu0 0.0
        %647 = vmatpush1.msra.mxu0 %v595
        %648 = vmatprep.subr.mxu0 0.0
        %649 = vmatpush1.msra.mxu0 %v596
        %650 = vmatprep.subr.mxu0 0.0
        %651 = vmatpush1.msra.mxu0 %v597
        %652 = vmatprep.subr.mxu0 0.0
        %653 = vmatpush1.msra.mxu0 %v598
        %654 = vmatprep.subr.mxu0 0.0
        %655 = vmatpush1.msra.mxu0 %v599
        %656 = vmatprep.subr.mxu0 0.0
        %657 = vmatpush1.msra.mxu0 %v600
        %658 = vmatprep.subr.mxu0 0.0
        %659 = vmatpush1.msra.mxu0 %v601
        %660 = vmatprep.subr.mxu0 0.0
        %661 = vmatpush1.msra.mxu0 %v602
        %662 = vmatprep.subr.mxu0 0.0
        %663 = vmatpush1.msra.mxu0 %v603
        %664 = vmatprep.subr.mxu0 0.0
        %665 = vmatpush1.msra.mxu0 %v604
        %666 = vmatprep.subr.mxu0 0.0
        %667 = vmatpush1.msra.mxu0 %v605
        %668 = vmatprep.subr.mxu0 0.0
        %669 = vmatpush1.msra.mxu0 %v606
        %670 = vmatprep.subr.mxu0 0.0
        %671 = vmatpush1.msra.mxu0 %v607
        %672 = vmatprep.subr.mxu0 0.0
        %673 = vmatpush1.msra.mxu0 %v608
        %674 = vmatprep.subr.mxu0 0.0
        %675 = vmatpush1.msra.mxu0 %v609
        %676 = vmatprep.subr.mxu0 0.0
        %677 = vmatpush1.msra.mxu0 %v610
        %678 = vmatprep.subr.mxu0 0.0
        %679 = vmatpush1.msra.mxu0 %v611
        %680 = vmatprep.subr.mxu0 0.0
        %681 = vmatpush1.msra.mxu0 %v612
        %682 = vmatprep.subr.mxu0 0.0
        %683 = vmatpush1.msra.mxu0 %v613
        %684 = vmatprep.subr.mxu0 0.0
        %685 = vmatpush1.msra.mxu0 %v614
        %686 = vmatprep.subr.mxu0 0.0
        %687 = vmatpush1.msra.mxu0 %v615
        %688 = vmatprep.subr.mxu0 0.0
        %689 = vmatpush1.msra.mxu0 %v616
        %690 = vmatprep.subr.mxu0 0.0
        %691 = vmatpush1.msra.mxu0 %v617
        %692 = vmatprep.subr.mxu0 0.0
        %693 = vmatpush1.msra.mxu0 %v618
        %694 = vmatprep.subr.mxu0 0.0
        %695 = vmatpush1.msra.mxu0 %v619
        %696 = vmatprep.subr.mxu0 0.0
        %697 = vmatpush1.msra.mxu0 %v620
        %698 = vmatprep.subr.mxu0 0.0
        %699 = vmatpush1.msra.mxu0 %v621
        %700 = vmatprep.subr.mxu0 0.0
        %701 = vmatpush1.msra.mxu0 %v622
        %702 = vmatprep.subr.mxu0 0.0
        %703 = vmatpush1.msra.mxu0 %v623
        %704 = vmatprep.subr.mxu0 0.0
        %705 = vmatpush1.msra.mxu0 %v624
        %706 = vmatprep.subr.mxu0 0.0
        %707 = vmatpush1.msra.mxu0 %v625
        %708 = vmatprep.subr.mxu0 0.0
        %709 = vmatpush1.msra.mxu0 %v626
        %710 = vmatprep.mubr.f32.mxu0 %v593
        %711 = vmatmul.mubr.f32.gmra.mrb[0].mxu0 %v591
        %v712 = vpop.f32.mrb[0].mxu0
        %v713 = vadd.f32 %v640, %v712
        %v714 = vpop.f32.mrb[0].mxu0
        %715 = vmatprep.mubr.f32.mxu0 %v594
        %716 = vmatmul.mubr.f32.gmra.mrb[0].mxu0 %v592
        %v717 = vpop.f32.mrb[0].mxu0
        %v718 = vadd.f32 %v640, %v717
        %v719 = vpop.f32.mrb[0].mxu0
        %720 = vdwg.mxu0
        %721 = vmatprep.subr.mxu0 0.0
        %722 = vmatpush1.msra.mxu0 %v627
        %723 = vmatprep.subr.mxu0 0.0
        %724 = vmatpush1.msra.mxu0 %v628
        %725 = vmatprep.subr.mxu0 0.0
        %726 = vmatpush1.msra.mxu0 %v629
        %727 = vmatprep.subr.mxu0 0.0
        %728 = vmatpush1.msra.mxu0 %v630
        %729 = vmatprep.subr.mxu0 0.0
        %730 = vmatpush1.msra.mxu0 %v631
        %731 = vmatprep.subr.mxu0 0.0
        %732 = vmatpush1.msra.mxu0 %v632
        %733 = vmatprep.subr.mxu0 0.0
        %734 = vmatpush1.msra.mxu0 %v633
        %735 = vmatprep.subr.mxu0 0.0
        %736 = vmatpush1.msra.mxu0 %v634
        %737 = vmatprep.subr.mxu0 0.0
        %738 = vmatpush1.msra.mxu0 0.0
        %739 = vmatprep.subr.mxu0 0.0
        %740 = vmatpush1.msra.mxu0 0.0
        %741 = vmatprep.subr.mxu0 0.0
        %742 = vmatpush1.msra.mxu0 0.0
        %743 = vmatprep.subr.mxu0 0.0
        %744 = vmatpush1.msra.mxu0 0.0
        %745 = vmatprep.subr.mxu0 0.0
        %746 = vmatpush1.msra.mxu0 0.0
        %747 = vmatprep.subr.mxu0 0.0
        %748 = vmatpush1.msra.mxu0 0.0
        %749 = vmatprep.subr.mxu0 0.0
        %750 = vmatpush1.msra.mxu0 0.0
        %751 = vmatprep.subr.mxu0 0.0
        %752 = vmatpush1.msra.mxu0 0.0
        %753 = vmatprep.subr.mxu0 0.0
        %754 = vmatpush1.msra.mxu0 0.0
        %755 = vmatprep.subr.mxu0 0.0
        %756 = vmatpush1.msra.mxu0 0.0
        %757 = vmatprep.subr.mxu0 0.0
        %758 = vmatpush1.msra.mxu0 0.0
        %759 = vmatprep.subr.mxu0 0.0
        %760 = vmatpush1.msra.mxu0 0.0
        %761 = vmatprep.subr.mxu0 0.0
        %762 = vmatpush1.msra.mxu0 0.0
        %763 = vmatprep.subr.mxu0 0.0
        %764 = vmatpush1.msra.mxu0 0.0
        %765 = vmatprep.subr.mxu0 0.0
        %766 = vmatpush1.msra.mxu0 0.0
        %767 = vmatprep.subr.mxu0 0.0
        %768 = vmatpush1.msra.mxu0 0.0
        %769 = vmatprep.subr.mxu0 0.0
        %770 = vmatpush1.msra.mxu0 0.0
        %771 = vmatprep.subr.mxu0 0.0
        %772 = vmatpush1.msra.mxu0 0.0
        %773 = vmatprep.subr.mxu0 0.0
        %774 = vmatpush1.msra.mxu0 0.0
        %775 = vmatprep.subr.mxu0 0.0
        %776 = vmatpush1.msra.mxu0 0.0
        %777 = vmatprep.subr.mxu0 0.0
        %778 = vmatpush1.msra.mxu0 0.0
        %779 = vmatprep.subr.mxu0 0.0
        %780 = vmatpush1.msra.mxu0 0.0
        %781 = vmatprep.subr.mxu0 0.0
        %782 = vmatpush1.msra.mxu0 0.0
        %783 = vmatprep.subr.mxu0 0.0
        %784 = vmatpush1.msra.mxu0 0.0
        %785 = vmatprep.mubr.f32.mxu0 0.0
        %786 = vmatmul.mubr.f32.gmra.mrb[0].mxu0 %v642
        %v787 = vpop.f32.mrb[0].mxu0
        %v788 = vadd.f32 %v713, %v787
        %v789 = vpop.f32.mrb[0].mxu0
        %790 = vmatprep.mubr.f32.mxu0 0.0
        %791 = vmatmul.mubr.f32.gmra.mrb[0].mxu0 %v644
        %v792 = vpop.f32.mrb[0].mxu0
        %v793 = vadd.f32 %v718, %v792
        %v794 = vpop.f32.mrb[0].mxu0
        %795 = vdwg.mxu0
        %v796 = vxor.u32 %v788, 2147483648
        %v797 = vxor.u32 %v793, 2147483648
        %v798 = vmul.f32 %v796, 1.442695
        %v799 = vpow.pop %v798
        %v800 = vmul.f32 %v797, 1.442695
        %v801 = vpow.pop %v800
        %v802 = vadd.f32 %v799, 1.0
        %v803 = vadd.f32 %v801, 1.0
        %v804 = vrcp.pop %v802
        %v805 = vmul.f32 1.0, %v804
        %v806 = vrcp.pop %v803
        %v807 = vmul.f32 1.0, %v806
        %810 = vrot.lane.b32.xlu0 %v805, 96
        %v811 = vpop.permute.xlu0 %810
        %812 = vrot.lane.b32.xlu0 %v807, 96
        %v813 = vpop.permute.xlu0 %812
        %v816 = vmul.f32 %v788, %v811
        %v817 = vmul.f32 %v793, %v813
        %v818 = vld [vmem:[%s7] sm:$0x1]
        %v820 = vlaneseq
        %v821 = vshrl.u32 %v820, 7
        %v822 = vsub.s32 0, %v821
        %v823 = vrot.slane %v818, %v822
        %v825 = vmul.f32 %v816, %v823
        %v826 = vmul.f32 %v817, %v823
        %v827 = vld [vmem:[%s8] sm:$0x1]
        %v829 = vlaneseq
        %v830 = vshrl.u32 %v829, 7
        %v831 = vsub.s32 0, %v830
        %v832 = vrot.slane %v827, %v831
        %v834 = vadd.f32 %v825, %v832
        %v835 = vadd.f32 %v826, %v832
        %v836 = vld [vmem:[%s9] sm:$0xff]
        %v837 = vld [vmem:[%s9 + $0x8] sm:$0xff]
        %v838 = vld [vmem:[%s9 + $0x10] sm:$0xff]
        %v839 = vld [vmem:[%s9 + $0x18] sm:$0xff]
        %v840 = vld [vmem:[%s10] sm:$0x1]
        %v842 = vlaneseq
        %v843 = vshrl.u32 %v842, 7
        %v844 = vsub.s32 0, %v843
        %v845 = vrot.slane %v840, %v844
        %v848 = vsel %vm387, %v834, 0
        %v851 = vsel %vm387, %v835, 0
        %853 = vmatprep.subr.mxu0 0.0
        %854 = vmatpush1.msra.mxu0 %v836
        %855 = vmatprep.subr.mxu0 0.0
        %856 = vmatpush1.msra.mxu0 %v837
        %857 = vmatprep.subr.mxu0 0.0
        %858 = vmatpush1.msra.mxu0 %v838
        %859 = vmatprep.subr.mxu0 0.0
        %860 = vmatpush1.msra.mxu0 %v839
        %861 = vmatprep.subr.mxu0 0.0
        %862 = vmatpush1.msra.mxu0 0.0
        %863 = vmatprep.subr.mxu0 0.0
        %864 = vmatpush1.msra.mxu0 0.0
        %865 = vmatprep.subr.mxu0 0.0
        %866 = vmatpush1.msra.mxu0 0.0
        %867 = vmatprep.subr.mxu0 0.0
        %868 = vmatpush1.msra.mxu0 0.0
        %869 = vmatprep.subr.mxu0 0.0
        %870 = vmatpush1.msra.mxu0 0.0
        %871 = vmatprep.subr.mxu0 0.0
        %872 = vmatpush1.msra.mxu0 0.0
        %873 = vmatprep.subr.mxu0 0.0
        %874 = vmatpush1.msra.mxu0 0.0
        %875 = vmatprep.subr.mxu0 0.0
        %876 = vmatpush1.msra.mxu0 0.0
        %877 = vmatprep.subr.mxu0 0.0
        %878 = vmatpush1.msra.mxu0 0.0
        %879 = vmatprep.subr.mxu0 0.0
        %880 = vmatpush1.msra.mxu0 0.0
        %881 = vmatprep.subr.mxu0 0.0
        %882 = vmatpush1.msra.mxu0 0.0
        %883 = vmatprep.subr.mxu0 0.0
        %884 = vmatpush1.msra.mxu0 0.0
        %885 = vmatprep.subr.mxu0 0.0
        %886 = vmatpush1.msra.mxu0 0.0
        %887 = vmatprep.subr.mxu0 0.0
        %888 = vmatpush1.msra.mxu0 0.0
        %889 = vmatprep.subr.mxu0 0.0
        %890 = vmatpush1.msra.mxu0 0.0
        %891 = vmatprep.subr.mxu0 0.0
        %892 = vmatpush1.msra.mxu0 0.0
        %893 = vmatprep.subr.mxu0 0.0
        %894 = vmatpush1.msra.mxu0 0.0
        %895 = vmatprep.subr.mxu0 0.0
        %896 = vmatpush1.msra.mxu0 0.0
        %897 = vmatprep.subr.mxu0 0.0
        %898 = vmatpush1.msra.mxu0 0.0
        %899 = vmatprep.subr.mxu0 0.0
        %900 = vmatpush1.msra.mxu0 0.0
        %901 = vmatprep.subr.mxu0 0.0
        %902 = vmatpush1.msra.mxu0 0.0
        %903 = vmatprep.subr.mxu0 0.0
        %904 = vmatpush1.msra.mxu0 0.0
        %905 = vmatprep.subr.mxu0 0.0
        %906 = vmatpush1.msra.mxu0 0.0
        %907 = vmatprep.subr.mxu0 0.0
        %908 = vmatpush1.msra.mxu0 0.0
        %909 = vmatprep.subr.mxu0 0.0
        %910 = vmatpush1.msra.mxu0 0.0
        %911 = vmatprep.subr.mxu0 0.0
        %912 = vmatpush1.msra.mxu0 0.0
        %913 = vmatprep.subr.mxu0 0.0
        %914 = vmatpush1.msra.mxu0 0.0
        %915 = vmatprep.subr.mxu0 0.0
        %916 = vmatpush1.msra.mxu0 0.0
        %917 = vmatprep.mubr.f32.mxu0 0.0
        %918 = vmatmul.mubr.f32.gmra.mrb[0].mxu0 %v848
        %v919 = vpop.f32.mrb[0].mxu0
        %v920 = vadd.f32 %v845, %v919
        %v921 = vpop.f32.mrb[0].mxu0
        %922 = vmatprep.mubr.f32.mxu0 0.0
        %923 = vmatmul.mubr.f32.gmra.mrb[0].mxu0 %v851
        %v924 = vpop.f32.mrb[0].mxu0
        %v925 = vadd.f32 %v845, %v924
        %v926 = vpop.f32.mrb[0].mxu0
        %927 = vdwg.mxu0
        %928 = vst.msk [vmem:[%s379] sm:$0xff] %vm387, %v920
        %929 = vst.msk [vmem:[%s379 + $0x8] sm:$0xff] %vm387, %v925
        %s930 = sand.u32 %s269, 1
        %s931 = scalar_lea.sflag [#allocation3], %s930
        %s932 = sand.u32 %s269, 1
        %s933 = smul.addr %s932, 16
        %s934 = scalar_lea.vmem [#allocation2], %s933
        // Predicated region
        $region65: #{tpu_custom_call.1} parent=63 // pred_check
          %p935 = pneg %p279
        $region66: #{tpu_custom_call.1} parent=63 // pred_check_branch
          %937 = sbr.rel (%p935) target = $region68
        $region67: #{tpu_custom_call.1} parent=63 // pred_region
          %s939 = ssub.s32 256, 256
          %940 = vsyncadd %s931, %s939
          %s941 = smul.addr %s25, 2
          %s942 = smul.addr %s941, 128
          %s943 = scalar_lea.hbm %s11, %s942
          %s944 = sshll.u32 %s934, 4
          %s945 = int_to_ptr.vmem [resolvable:$true] %s944
          %950 = dma.vmem_to_hbm [thread:$0]  %s945, 256, %s943, %s931, 128, 128, 8
        $region68: #{tpu_custom_call.1} parent=63 // pred_fallthru
          _
      $region64: #{tpu_custom_call.1} parent=5 // pred_fallthru
        _
      %p951 = scmp.le.s32.totalorder 2, %s20
      // Predicated region
      $region69: #{tpu_custom_call.1} parent=5 // pred_check
        %p952 = pneg %p951
      $region70: #{tpu_custom_call.1} parent=5 // pred_check_branch
        %954 = sbr.rel (%p952) target = $region72
      $region71: #{tpu_custom_call.1} parent=5 // pred_region
        %s955 = ssub.s32 %s20, 2
        // Predicated region
        $region73: #{tpu_custom_call.1} parent=71 // pred_check
          %p956 = pneg %p285
        $region74: #{tpu_custom_call.1} parent=71 // pred_check_branch
          %958 = sbr.rel (%p956) target = $region76
        $region75: #{tpu_custom_call.1} parent=71 // pred_region
          %s959 = sand.u32 %s270, 1
          %s960 = scalar_lea.sflag [#allocation3], %s959
          %s961 = sand.u32 %s270, 1
          %s962 = smul.addr %s961, 16
          %s963 = scalar_lea.vmem [#allocation2], %s962
          %964 = dma.done %s960, 256
        $region76: #{tpu_custom_call.1} parent=71 // pred_fallthru
          _
      $region72: #{tpu_custom_call.1} parent=5 // pred_fallthru
        _
    $region6: #{tpu_custom_call.1} parent=1 // loop_footer
      %s24 = sadd.s32 1, %s20
    $region7: #{tpu_custom_call.1} parent=1 // loop_footer_branch
      %19 = sbr.rel target = $region3
    $region8: #{tpu_custom_call.1} parent=1 // loop_exit
      _
    %965 = vsyncpa [#allocation3], 1
    %s966 = scalar_lea.sflag [#allocation3], 1
    %967 = vsyncpa %s966, 1

</llo_original>
